<compile_context>
chip_gen: v6e
topology: v6e:2x2x1
jax: 0.10.0
libtpu: 0.0.40
codegen_flags: <defaults>
</compile_context>

<pallas_src>
import jax
import jax.numpy as jnp
from jax.experimental import pallas as pl
from jax.experimental.pallas import tpu as pltpu


# ----------------------------------------------------------------------------- helpers
def _round_up(x, m):
    return ((x + m - 1) // m) * m


# ----------------------------------------------------------------------------- kernel
def _make_mlp_kernel(n_layers, nonlinearity):
    """Transposed MLP on a (D_in, TM) column slab.

    For each layer: h^T <- W^T @ h^T + b[:, None]; activation between layers,
    none after the last.  All intermediates are (H, TM) -> lane-dense."""
    act = jnp.tanh if nonlinearity == "tanh" else (lambda v: jnp.maximum(v, 0.0))

    def kernel(x_ref, *refs):
        it = iter(refs)
        layers = [(next(it), next(it)) for _ in range(n_layers)]   # (W^T, b) pairs
        out_ref = next(it)

        h = x_ref[...].astype(jnp.float32)                          # (D_in, TM)
        for i, (wt_ref, b_ref) in enumerate(layers):
            # (H_out, H_in) @ (H_in, TM) + (H_out, 1)  ->  (H_out, TM)
            h = jnp.dot(wt_ref[...], h, preferred_element_type=jnp.float32) + b_ref[...]
            if i < n_layers - 1:
                h = act(h)
        out_ref[...] = h.astype(out_ref.dtype)                      # (P, TM), lane-dense

    return kernel


# ----------------------------------------------------------------------------- wrapper
def object_model_forward(params, x, nonlinearity="tanh", row_tile=512):
    """Mirrors ObjectModel.forward.
       x: [B, O, D_in]  ->  [B, O, P]   (P = last layer width; activations keep
       their leading dims exactly like nn.Linear does)."""
    B, O, D = x.shape
    n_layers = len(params)
    P = params[-1][0].shape[1]

    # Fold batch * objects into one row dimension and put it on LANES:
    # x^T has shape (D_in, M).  (Tiny layout-plumbing transpose in the wrapper.)
    M = B * O
    xt = jnp.transpose(x.reshape(M, D))                 # (D, M)

    # Row (= lane) tile.  Lane-dim blocks must be a multiple of 128 or cover the
    # whole axis.  For M > 128 make sure there are >= 2 grid steps so v7x's two
    # TensorCores both get work; per-tile live state is tiny (tm * maxH * 4B).
    row_tile = max(128, (row_tile // 128) * 128)
    if M <= 128:
        tm = M                                          # single full-array block
    else:
        tm = min(row_tile, _round_up(-(-M // 2), 128))  # >=2 steps, multiple of 128
    grid = (pl.cdiv(M, tm),)                            # ragged last block: Pallas masks it

    # Weights passed torch-Linear style: W^T (out_features, in_features),
    # bias as (out_features, 1) so it broadcasts across lanes in-kernel.
    weight_args = []
    for (W, b) in params:
        weight_args += [W.T, b.reshape(-1, 1)]

    in_specs = [pl.BlockSpec((D, tm), lambda i: (0, i))]
    for w in weight_args:
        # full-array const block: block index never changes -> no per-step refetch
        in_specs.append(pl.BlockSpec(w.shape, lambda i: (0, 0)))

    # Advisory cost estimate so XLA does not treat the call as opaque/expensive.
    flops = 2 * M * sum(W.shape[0] * W.shape[1] for W, _ in params)
    transcendentals = (M * sum(W.shape[1] for W, _ in params[:-1])
                       if nonlinearity == "tanh" else 0)
    bytes_accessed = 4 * (M * D + M * P + sum(int(w.size) for w in weight_args))

    out_t = pl.pallas_call(
        _make_mlp_kernel(n_layers, nonlinearity),
        out_shape=jax.ShapeDtypeStruct((P, M), jnp.float32),
        grid=grid,
        in_specs=in_specs,
        out_specs=pl.BlockSpec((P, tm), lambda i: (0, i)),
        compiler_params=pltpu.CompilerParams(
            dimension_semantics=("parallel",)),          # rows independent -> 2 TCs on v7x
        cost_estimate=pl.CostEstimate(flops=flops,
                                      transcendentals=transcendentals,
                                      bytes_accessed=bytes_accessed),
    )(xt, *weight_args)

    # (P, M) -> (M, P) -> (B, O, P); tiny layout plumbing on the output.
    return jnp.transpose(out_t).reshape(B, O, P)


# ----------------------------------------------------------------------------- params
def init_object_model(key, input_size, model_size):
    """Same layer shapes as the torch module (layer_sizes = [input_size] + model_size).
       Weights stored as (in_features, out_features), torch-Linear-style uniform init."""
    layer_sizes = [input_size] + list(model_size)
    params = []
    for i in range(len(layer_sizes) - 1):
        key, k_w, k_b = jax.random.split(key, 3)
        bound = 1.0 / (layer_sizes[i] ** 0.5)
        W = jax.random.uniform(k_w, (layer_sizes[i], layer_sizes[i + 1]),
                               jnp.float32, -bound, bound)
        b = jax.random.uniform(k_b, (layer_sizes[i + 1],), jnp.float32, -bound, bound)
        params.append((W, b))
    return params


# ----------------------------------------------------------------------------- reference
def _reference_forward(params, x, nonlinearity="tanh"):
    act = jnp.tanh if nonlinearity == "tanh" else (lambda v: jnp.maximum(v, 0.0))
    out = x
    for i, (W, b) in enumerate(params):
        out = out @ W + b
        if i < len(params) - 1:
            out = act(out)
    return out


# ----------------------------------------------------------------------------- main
if __name__ == "__main__":
    B, O = 2, 8            # batch, n_objects
    D = 4                  # input_size (object state dim)
    model_size = [32, 32, 2]   # hidden, hidden, (speedX, speedY)

    key = jax.random.PRNGKey(0)
    params = init_object_model(key, D, list(model_size))

    kx = jax.random.split(jax.random.PRNGKey(0), 2)[1]
    x = jax.random.normal(kx, (B, O, D), jnp.float32)

    out = object_model_forward(params, x, nonlinearity="tanh")
    out = jax.block_until_ready(out)

    ref = _reference_forward(params, x, nonlinearity="tanh")
    assert out.shape == (B, O, model_size[-1])
    assert jnp.allclose(out, ref, atol=1e-4, rtol=1e-4)

    print("KERNEL_OK")
</pallas_src>

<mosaic_0001>
module attributes {stable_mosaic.version = 11 : i64} {
  func.func @kernel(%arg0: i32, %arg1: memref<4x16xf32, #tpu.memory_space<vmem>>, %arg2: memref<32x4xf32, #tpu.memory_space<vmem>>, %arg3: memref<32x1xf32, #tpu.memory_space<vmem>>, %arg4: memref<32x32xf32, #tpu.memory_space<vmem>>, %arg5: memref<32x1xf32, #tpu.memory_space<vmem>>, %arg6: memref<2x32xf32, #tpu.memory_space<vmem>>, %arg7: memref<2x1xf32, #tpu.memory_space<vmem>>, %arg8: memref<2x16xf32, #tpu.memory_space<vmem>>) attributes {dimension_semantics = [#tpu.dimension_semantics<parallel>], iteration_bounds = array<i64: 1>, scalar_prefetch = 0 : i64, scratch_operands = 0 : i64, tpu.core_type = #tpu.core_type<tc>, window_params = [{transform_indices = @transform_0, window_bounds = array<i64: 4, 16>}, {pipeline_mode = #tpu.pipeline_mode<synchronous>, transform_indices = @transform_1, window_bounds = array<i64: 32, 4>}, {pipeline_mode = #tpu.pipeline_mode<synchronous>, transform_indices = @transform_2, window_bounds = array<i64: 32, 1>}, {pipeline_mode = #tpu.pipeline_mode<synchronous>, transform_indices = @transform_3, window_bounds = array<i64: 32, 32>}, {pipeline_mode = #tpu.pipeline_mode<synchronous>, transform_indices = @transform_4, window_bounds = array<i64: 32, 1>}, {pipeline_mode = #tpu.pipeline_mode<synchronous>, transform_indices = @transform_5, window_bounds = array<i64: 2, 32>}, {pipeline_mode = #tpu.pipeline_mode<synchronous>, transform_indices = @transform_6, window_bounds = array<i64: 2, 1>}, {transform_indices = @transform_7, window_bounds = array<i64: 2, 16>}]} {
    %c0 = arith.constant 0 : index
    %c0_0 = arith.constant 0 : index
    %0 = vector.load %arg1[%c0, %c0_0] : memref<4x16xf32, #tpu.memory_space<vmem>>, vector<4x16xf32>
    %c0_1 = arith.constant 0 : index
    %c0_2 = arith.constant 0 : index
    %1 = vector.load %arg2[%c0_1, %c0_2] : memref<32x4xf32, #tpu.memory_space<vmem>>, vector<32x4xf32>
    %cst = arith.constant dense<0.000000e+00> : vector<32x16xf32>
    %2 = tpu.matmul %1, %0, %cst {dimension_numbers = #tpu.dot_dimension_numbers<[1], [0], [0], [1], [0, 0, 1, 1], [], []>} : vector<32x4xf32>, vector<4x16xf32>, vector<32x16xf32> -> vector<32x16xf32>
    %c0_3 = arith.constant 0 : index
    %c0_4 = arith.constant 0 : index
    %3 = vector.load %arg3[%c0_3, %c0_4] : memref<32x1xf32, #tpu.memory_space<vmem>>, vector<32x1xf32>
    %4 = vector.broadcast %3 : vector<32x1xf32> to vector<32x16xf32>
    %5 = arith.addf %2, %4 : vector<32x16xf32>
    %6 = math.tanh %5 : vector<32x16xf32>
    %c0_5 = arith.constant 0 : index
    %c0_6 = arith.constant 0 : index
    %7 = vector.load %arg4[%c0_5, %c0_6] : memref<32x32xf32, #tpu.memory_space<vmem>>, vector<32x32xf32>
    %cst_7 = arith.constant dense<0.000000e+00> : vector<32x16xf32>
    %8 = tpu.matmul %7, %6, %cst_7 {dimension_numbers = #tpu.dot_dimension_numbers<[1], [0], [0], [1], [0, 0, 1, 1], [], []>} : vector<32x32xf32>, vector<32x16xf32>, vector<32x16xf32> -> vector<32x16xf32>
    %c0_8 = arith.constant 0 : index
    %c0_9 = arith.constant 0 : index
    %9 = vector.load %arg5[%c0_8, %c0_9] : memref<32x1xf32, #tpu.memory_space<vmem>>, vector<32x1xf32>
    %10 = vector.broadcast %9 : vector<32x1xf32> to vector<32x16xf32>
    %11 = arith.addf %8, %10 : vector<32x16xf32>
    %12 = math.tanh %11 : vector<32x16xf32>
    %c0_10 = arith.constant 0 : index
    %c0_11 = arith.constant 0 : index
    %13 = vector.load %arg6[%c0_10, %c0_11] : memref<2x32xf32, #tpu.memory_space<vmem>>, vector<2x32xf32>
    %cst_12 = arith.constant dense<0.000000e+00> : vector<2x16xf32>
    %14 = tpu.matmul %13, %12, %cst_12 {dimension_numbers = #tpu.dot_dimension_numbers<[1], [0], [0], [1], [0, 0, 1, 1], [], []>} : vector<2x32xf32>, vector<32x16xf32>, vector<2x16xf32> -> vector<2x16xf32>
    %c0_13 = arith.constant 0 : index
    %c0_14 = arith.constant 0 : index
    %15 = vector.load %arg7[%c0_13, %c0_14] : memref<2x1xf32, #tpu.memory_space<vmem>>, vector<2x1xf32>
    %16 = vector.broadcast %15 : vector<2x1xf32> to vector<2x16xf32>
    %17 = arith.addf %14, %16 : vector<2x16xf32>
    %c0_15 = arith.constant 0 : index
    %c0_16 = arith.constant 0 : index
    %18 = vector.load %arg8[%c0_15, %c0_16] : memref<2x16xf32, #tpu.memory_space<vmem>>, vector<2x16xf32>
    tpu.vector_store %arg8[%c0_15, %c0_16], %17 {strides = array<i32>} : memref<2x16xf32, #tpu.memory_space<vmem>>, vector<2x16xf32>,
    return
  }
  func.func @transform_0(%arg0: i32) -> (i32, i32) {
    %c0_i32 = arith.constant 0 : i32
    %c0_i32_0 = arith.constant 0 : i32
    return %c0_i32, %arg0 : i32, i32
  }
  func.func @transform_1(%arg0: i32) -> (i32, i32) {
    %c0_i32 = arith.constant 0 : i32
    %c0_i32_0 = arith.constant 0 : i32
    %c0_i32_1 = arith.constant 0 : i32
    return %c0_i32, %c0_i32_0 : i32, i32
  }
  func.func @transform_2(%arg0: i32) -> (i32, i32) {
    %c0_i32 = arith.constant 0 : i32
    %c0_i32_0 = arith.constant 0 : i32
    %c0_i32_1 = arith.constant 0 : i32
    return %c0_i32, %c0_i32_0 : i32, i32
  }
  func.func @transform_3(%arg0: i32) -> (i32, i32) {
    %c0_i32 = arith.constant 0 : i32
    %c0_i32_0 = arith.constant 0 : i32
    %c0_i32_1 = arith.constant 0 : i32
    return %c0_i32, %c0_i32_0 : i32, i32
  }
  func.func @transform_4(%arg0: i32) -> (i32, i32) {
    %c0_i32 = arith.constant 0 : i32
    %c0_i32_0 = arith.constant 0 : i32
    %c0_i32_1 = arith.constant 0 : i32
    return %c0_i32, %c0_i32_0 : i32, i32
  }
  func.func @transform_5(%arg0: i32) -> (i32, i32) {
    %c0_i32 = arith.constant 0 : i32
    %c0_i32_0 = arith.constant 0 : i32
    %c0_i32_1 = arith.constant 0 : i32
    return %c0_i32, %c0_i32_0 : i32, i32
  }
  func.func @transform_6(%arg0: i32) -> (i32, i32) {
    %c0_i32 = arith.constant 0 : i32
    %c0_i32_0 = arith.constant 0 : i32
    %c0_i32_1 = arith.constant 0 : i32
    return %c0_i32, %c0_i32_0 : i32, i32
  }
  func.func @transform_7(%arg0: i32) -> (i32, i32) {
    %c0_i32 = arith.constant 0 : i32
    %c0_i32_0 = arith.constant 0 : i32
    return %c0_i32, %arg0 : i32, i32
  }
}

</mosaic_0001>

<llo_original>
// kernel: tpu_custom_call.1
$region0: #{tpu_custom_call.1}
  #allocation0 [shape = 'u32[]', space=smem, size = 0x4, offset = 0x4, fixed_abs, tag = 'smem constant byte address 0x4 - core index']
  #allocation1 [shape = 'u32[144,128]{1,0:T(1,128)}', space=vmem, size = 0x12000, scoped, tag = 'internal scratch']
  %s0 = inlined_call_operand.vmem [shape: f32[4,16], index: 0, kind: input, shape index: {}]
  %s1 = inlined_call_operand.vmem [shape: f32[32,4], index: 1, kind: input, shape index: {}]
  %s2 = inlined_call_operand.vmem [shape: f32[32,1], index: 2, kind: input, shape index: {}]
  %s3 = inlined_call_operand.vmem [shape: f32[32,32], index: 3, kind: input, shape index: {}]
  %s4 = inlined_call_operand.vmem [shape: f32[32,1], index: 4, kind: input, shape index: {}]
  %s5 = inlined_call_operand.vmem [shape: f32[2,32], index: 5, kind: input, shape index: {}]
  %s6 = inlined_call_operand.vmem [shape: f32[2,1], index: 6, kind: input, shape index: {}]
  %s7 = inlined_call_operand.hbm [shape: f32[2,16], index: 7, kind: output, shape index: {}]
  %s8 = sld [smem:[#allocation0]]
  $region38: #{tpu_custom_call.1} parent=0
    _
  %s10 = ssub.s32 1, %s8
  %s11 = scalar_select 0, %s10, %s8
  $region1: #{tpu_custom_call.1} parent=0
    #allocation2 [shape = 'u8[1024]{0}', space=vmem, size = 0x400, scoped, tag = 'output window, operand 0, single buffered']
    #allocation3 [shape = 's32[1]{0}', space=sflag, size = 0x4, scoped, tag = 'scoped memory for tpu_custom_call.1']
    %12 = vsyncpa [#allocation3], 0
    // Predicated region
    $region2: #{tpu_custom_call.1} parent=1 // pred_check
      _
    $region3: #{tpu_custom_call.1} parent=1 // pred_check_branch
      %14 = sbr.rel (0) target = $region5
    $region4: #{tpu_custom_call.1} parent=1 // pred_region
      _
    $region5: #{tpu_custom_call.1} parent=1 // pred_fallthru
      _
    // Predicated region
    $region6: #{tpu_custom_call.1} parent=1 // pred_check
      _
    $region7: #{tpu_custom_call.1} parent=1 // pred_check_branch
      %16 = sbr.rel (0) target = $region9
    $region8: #{tpu_custom_call.1} parent=1 // pred_region
      _
    $region9: #{tpu_custom_call.1} parent=1 // pred_fallthru
      _
    // Predicated region
    $region10: #{tpu_custom_call.1} parent=1 // pred_check
      _
    $region11: #{tpu_custom_call.1} parent=1 // pred_check_branch
      %18 = sbr.rel (0) target = $region13
    $region12: #{tpu_custom_call.1} parent=1 // pred_region
      _
    $region13: #{tpu_custom_call.1} parent=1 // pred_fallthru
      _
    // Predicated region
    $region14: #{tpu_custom_call.1} parent=1 // pred_check
      _
    $region15: #{tpu_custom_call.1} parent=1 // pred_check_branch
      %20 = sbr.rel (0) target = $region17
    $region16: #{tpu_custom_call.1} parent=1 // pred_region
      _
    $region17: #{tpu_custom_call.1} parent=1 // pred_fallthru
      _
    // Predicated region
    $region18: #{tpu_custom_call.1} parent=1 // pred_check
      _
    $region19: #{tpu_custom_call.1} parent=1 // pred_check_branch
      %22 = sbr.rel (0) target = $region21
    $region20: #{tpu_custom_call.1} parent=1 // pred_region
      _
    $region21: #{tpu_custom_call.1} parent=1 // pred_fallthru
      _
    // Predicated region
    $region22: #{tpu_custom_call.1} parent=1 // pred_check
      _
    $region23: #{tpu_custom_call.1} parent=1 // pred_check_branch
      %24 = sbr.rel (0) target = $region25
    $region24: #{tpu_custom_call.1} parent=1 // pred_region
      _
    $region25: #{tpu_custom_call.1} parent=1 // pred_fallthru
      _
    // Predicated region
    $region26: #{tpu_custom_call.1} parent=1 // pred_check
      _
    $region27: #{tpu_custom_call.1} parent=1 // pred_check_branch
      %26 = sbr.rel (0) target = $region29
    $region28: #{tpu_custom_call.1} parent=1 // pred_region
      _
    $region29: #{tpu_custom_call.1} parent=1 // pred_fallthru
      _
    %v27 = vld [vmem:[%s0] sm:$0xf]
    %v28 = vld [vmem:[%s1] sm:$0xff]
    %v29 = vld [vmem:[%s1 + $0x8] sm:$0xff]
    %v30 = vld [vmem:[%s1 + $0x10] sm:$0xff]
    %v31 = vld [vmem:[%s1 + $0x18] sm:$0xff]
    %v32 = vld [vmem:[%s2] sm:$0xff]
    %v33 = vld [vmem:[%s2 + $0x8] sm:$0xff]
    %v34 = vld [vmem:[%s2 + $0x10] sm:$0xff]
    %v35 = vld [vmem:[%s2 + $0x18] sm:$0xff]
    %37 = vset.pattern.permute.xlu0 0
    %38 = vperm.xlu0 %37, %v32
    %v39 = vpop.permute.xlu0 %38
    %42 = vset.pattern.permute.xlu0 0
    %43 = vperm.xlu0 %42, %v33
    %v44 = vpop.permute.xlu0 %43
    %47 = vset.pattern.permute.xlu0 0
    %48 = vperm.xlu0 %47, %v34
    %v49 = vpop.permute.xlu0 %48
    %52 = vset.pattern.permute.xlu0 0
    %53 = vperm.xlu0 %52, %v35
    %v54 = vpop.permute.xlu0 %53
    %vm56 = vcmask 31744
    %v58 = vsel %vm56, %v28, 0
    %v61 = vsel %vm56, %v29, 0
    %v64 = vsel %vm56, %v30, 0
    %v67 = vsel %vm56, %v31, 0
    %vm69 = vcmask 1043456
    %v71 = vsel %vm69, %v27, 0
    %73 = vmatprep.subr.mxu0 0.0
    %74 = vmatpush1.msra.mxu0 0.0
    %75 = vmatprep.subr.mxu0 0.0
    %76 = vmatpush1.msra.mxu0 0.0
    %77 = vmatprep.subr.mxu0 0.0
    %78 = vmatpush1.msra.mxu0 0.0
    %79 = vmatprep.subr.mxu0 0.0
    %80 = vmatpush1.msra.mxu0 0.0
    %81 = vmatprep.subr.mxu0 0.0
    %82 = vmatpush1.msra.mxu0 0.0
    %83 = vmatprep.subr.mxu0 0.0
    %84 = vmatpush1.msra.mxu0 0.0
    %85 = vmatprep.subr.mxu0 0.0
    %86 = vmatpush1.msra.mxu0 0.0
    %87 = vmatprep.subr.mxu0 0.0
    %88 = vmatpush1.msra.mxu0 0.0
    %89 = vmatprep.subr.mxu0 0.0
    %90 = vmatpush1.msra.mxu0 0.0
    %91 = vmatprep.subr.mxu0 0.0
    %92 = vmatpush1.msra.mxu0 0.0
    %93 = vmatprep.subr.mxu0 0.0
    %94 = vmatpush1.msra.mxu0 0.0
    %95 = vmatprep.subr.mxu0 0.0
    %96 = vmatpush1.msra.mxu0 0.0
    %97 = vmatprep.subr.mxu0 0.0
    %98 = vmatpush1.msra.mxu0 0.0
    %99 = vmatprep.subr.mxu0 0.0
    %100 = vmatpush1.msra.mxu0 0.0
    %101 = vmatprep.subr.mxu0 0.0
    %102 = vmatpush1.msra.mxu0 0.0
    %103 = vmatprep.subr.mxu0 0.0
    %104 = vmatpush1.msra.mxu0 %v71
    %105 = vmatprep.subr.mxu0 0.0
    %106 = vmatpush2.msra.mxu0 0.0
    %107 = vmatprep.subr.mxu0 0.0
    %108 = vmatpush2.msra.mxu0 0.0
    %109 = vmatprep.subr.mxu0 0.0
    %110 = vmatpush2.msra.mxu0 0.0
    %111 = vmatprep.subr.mxu0 0.0
    %112 = vmatpush2.msra.mxu0 0.0
    %113 = vmatprep.subr.mxu0 0.0
    %114 = vmatpush2.msra.mxu0 0.0
    %115 = vmatprep.subr.mxu0 0.0
    %116 = vmatpush2.msra.mxu0 0.0
    %117 = vmatprep.subr.mxu0 0.0
    %118 = vmatpush2.msra.mxu0 0.0
    %119 = vmatprep.subr.mxu0 0.0
    %120 = vmatpush2.msra.mxu0 0.0
    %121 = vmatprep.subr.mxu0 0.0
    %122 = vmatpush2.msra.mxu0 0.0
    %123 = vmatprep.subr.mxu0 0.0
    %124 = vmatpush2.msra.mxu0 0.0
    %125 = vmatprep.subr.mxu0 0.0
    %126 = vmatpush2.msra.mxu0 0.0
    %127 = vmatprep.subr.mxu0 0.0
    %128 = vmatpush2.msra.mxu0 0.0
    %129 = vmatprep.subr.mxu0 0.0
    %130 = vmatpush2.msra.mxu0 0.0
    %131 = vmatprep.subr.mxu0 0.0
    %132 = vmatpush2.msra.mxu0 0.0
    %133 = vmatprep.subr.mxu0 0.0
    %134 = vmatpush2.msra.mxu0 0.0
    %135 = vmatprep.subr.mxu0 0.0
    %136 = vmatpush2.msra.mxu0 0.0
    %137 = vmatprep.mubr.f32.mxu0 0.0
    %138 = vmatmul.mubr.f32.gmra.mxu0 %v58
    %v139 = vpop.f32.mrf.mxu0
    %v140 = vadd.f32 %v39, %v139
    %v141 = vpop.f32.mrf.mxu0
    %142 = vmatprep.mubr.f32.mxu0 0.0
    %143 = vmatmul.mubr.f32.gmra.mxu0 %v61
    %v144 = vpop.f32.mrf.mxu0
    %v145 = vadd.f32 %v44, %v144
    %v146 = vpop.f32.mrf.mxu0
    %147 = vmatprep.mubr.f32.mxu0 0.0
    %148 = vmatmul.mubr.f32.gmra.mxu0 %v64
    %v149 = vpop.f32.mrf.mxu0
    %v150 = vadd.f32 %v49, %v149
    %v151 = vpop.f32.mrf.mxu0
    %152 = vmatprep.mubr.f32.mxu0 0.0
    %153 = vmatmul.mubr.f32.gmra.mxu0 %v67
    %v154 = vpop.f32.mrf.mxu0
    %v155 = vadd.f32 %v54, %v154
    %v156 = vpop.f32.mrf.mxu0
    %157 = vdwg.mxu0
    %v158 = vtanh.pop %v140
    %v159 = vtanh.pop %v145
    %v160 = vtanh.pop %v150
    %v161 = vtanh.pop %v155
    %v162 = vld [vmem:[%s3] sm:$0xff]
    %v163 = vld [vmem:[%s3 + $0x8] sm:$0xff]
    %v164 = vld [vmem:[%s3 + $0x10] sm:$0xff]
    %v165 = vld [vmem:[%s3 + $0x18] sm:$0xff]
    %v166 = vld [vmem:[%s4] sm:$0xff]
    %v167 = vld [vmem:[%s4 + $0x8] sm:$0xff]
    %v168 = vld [vmem:[%s4 + $0x10] sm:$0xff]
    %v169 = vld [vmem:[%s4 + $0x18] sm:$0xff]
    %171 = vset.pattern.permute.xlu0 0
    %172 = vperm.xlu0 %171, %v166
    %v173 = vpop.permute.xlu0 %172
    %176 = vset.pattern.permute.xlu0 0
    %177 = vperm.xlu0 %176, %v167
    %v178 = vpop.permute.xlu0 %177
    %181 = vset.pattern.permute.xlu0 0
    %182 = vperm.xlu0 %181, %v168
    %v183 = vpop.permute.xlu0 %182
    %186 = vset.pattern.permute.xlu0 0
    %187 = vperm.xlu0 %186, %v169
    %v188 = vpop.permute.xlu0 %187
    %vm190 = vcmask 261120
    %v192 = vsel %vm190, %v162, 0
    %v195 = vsel %vm190, %v163, 0
    %v198 = vsel %vm190, %v164, 0
    %v201 = vsel %vm190, %v165, 0
    %203 = vmatprep.subr.mxu0 0.0
    %204 = vmatpush1.msra.mxu0 0.0
    %205 = vmatprep.subr.mxu0 0.0
    %206 = vmatpush1.msra.mxu0 0.0
    %207 = vmatprep.subr.mxu0 0.0
    %208 = vmatpush1.msra.mxu0 0.0
    %209 = vmatprep.subr.mxu0 0.0
    %210 = vmatpush1.msra.mxu0 0.0
    %211 = vmatprep.subr.mxu0 0.0
    %212 = vmatpush1.msra.mxu0 0.0
    %213 = vmatprep.subr.mxu0 0.0
    %214 = vmatpush1.msra.mxu0 0.0
    %215 = vmatprep.subr.mxu0 0.0
    %216 = vmatpush1.msra.mxu0 0.0
    %217 = vmatprep.subr.mxu0 0.0
    %218 = vmatpush1.msra.mxu0 0.0
    %219 = vmatprep.subr.mxu0 0.0
    %220 = vmatpush1.msra.mxu0 0.0
    %221 = vmatprep.subr.mxu0 0.0
    %222 = vmatpush1.msra.mxu0 0.0
    %223 = vmatprep.subr.mxu0 0.0
    %224 = vmatpush1.msra.mxu0 0.0
    %225 = vmatprep.subr.mxu0 0.0
    %226 = vmatpush1.msra.mxu0 0.0
    %227 = vmatprep.subr.mxu0 0.0
    %228 = vmatpush1.msra.mxu0 %v161
    %229 = vmatprep.subr.mxu0 0.0
    %230 = vmatpush1.msra.mxu0 %v160
    %231 = vmatprep.subr.mxu0 0.0
    %232 = vmatpush1.msra.mxu0 %v159
    %233 = vmatprep.subr.mxu0 0.0
    %234 = vmatpush1.msra.mxu0 %v158
    %235 = vmatprep.subr.mxu0 0.0
    %236 = vmatpush2.msra.mxu0 0.0
    %237 = vmatprep.subr.mxu0 0.0
    %238 = vmatpush2.msra.mxu0 0.0
    %239 = vmatprep.subr.mxu0 0.0
    %240 = vmatpush2.msra.mxu0 0.0
    %241 = vmatprep.subr.mxu0 0.0
    %242 = vmatpush2.msra.mxu0 0.0
    %243 = vmatprep.subr.mxu0 0.0
    %244 = vmatpush2.msra.mxu0 0.0
    %245 = vmatprep.subr.mxu0 0.0
    %246 = vmatpush2.msra.mxu0 0.0
    %247 = vmatprep.subr.mxu0 0.0
    %248 = vmatpush2.msra.mxu0 0.0
    %249 = vmatprep.subr.mxu0 0.0
    %250 = vmatpush2.msra.mxu0 0.0
    %251 = vmatprep.subr.mxu0 0.0
    %252 = vmatpush2.msra.mxu0 0.0
    %253 = vmatprep.subr.mxu0 0.0
    %254 = vmatpush2.msra.mxu0 0.0
    %255 = vmatprep.subr.mxu0 0.0
    %256 = vmatpush2.msra.mxu0 0.0
    %257 = vmatprep.subr.mxu0 0.0
    %258 = vmatpush2.msra.mxu0 0.0
    %259 = vmatprep.subr.mxu0 0.0
    %260 = vmatpush2.msra.mxu0 0.0
    %261 = vmatprep.subr.mxu0 0.0
    %262 = vmatpush2.msra.mxu0 0.0
    %263 = vmatprep.subr.mxu0 0.0
    %264 = vmatpush2.msra.mxu0 0.0
    %265 = vmatprep.subr.mxu0 0.0
    %266 = vmatpush2.msra.mxu0 0.0
    %267 = vmatprep.mubr.f32.mxu0 0.0
    %268 = vmatmul.mubr.f32.gmra.mxu0 %v192
    %v269 = vpop.f32.mrf.mxu0
    %v270 = vadd.f32 %v173, %v269
    %v271 = vpop.f32.mrf.mxu0
    %272 = vmatprep.mubr.f32.mxu0 0.0
    %273 = vmatmul.mubr.f32.gmra.mxu0 %v195
    %v274 = vpop.f32.mrf.mxu0
    %v275 = vadd.f32 %v178, %v274
    %v276 = vpop.f32.mrf.mxu0
    %277 = vmatprep.mubr.f32.mxu0 0.0
    %278 = vmatmul.mubr.f32.gmra.mxu0 %v198
    %v279 = vpop.f32.mrf.mxu0
    %v280 = vadd.f32 %v183, %v279
    %v281 = vpop.f32.mrf.mxu0
    %282 = vmatprep.mubr.f32.mxu0 0.0
    %283 = vmatmul.mubr.f32.gmra.mxu0 %v201
    %v284 = vpop.f32.mrf.mxu0
    %v285 = vadd.f32 %v188, %v284
    %v286 = vpop.f32.mrf.mxu0
    %287 = vdwg.mxu0
    %v288 = vtanh.pop %v270
    %v289 = vtanh.pop %v275
    %v290 = vtanh.pop %v280
    %v291 = vtanh.pop %v285
    %v292 = vld [vmem:[%s5] sm:$0x3]
    %v293 = vld [vmem:[%s6] sm:$0x3]
    %295 = vset.pattern.permute.xlu0 0
    %296 = vperm.xlu0 %295, %v293
    %v297 = vpop.permute.xlu0 %296
    %v300 = vsel %vm190, %v292, 0
    %302 = vmatprep.subr.mxu0 0.0
    %303 = vmatpush1.msra.mxu0 0.0
    %304 = vmatprep.subr.mxu0 0.0
    %305 = vmatpush1.msra.mxu0 0.0
    %306 = vmatprep.subr.mxu0 0.0
    %307 = vmatpush1.msra.mxu0 0.0
    %308 = vmatprep.subr.mxu0 0.0
    %309 = vmatpush1.msra.mxu0 0.0
    %310 = vmatprep.subr.mxu0 0.0
    %311 = vmatpush1.msra.mxu0 0.0
    %312 = vmatprep.subr.mxu0 0.0
    %313 = vmatpush1.msra.mxu0 0.0
    %314 = vmatprep.subr.mxu0 0.0
    %315 = vmatpush1.msra.mxu0 0.0
    %316 = vmatprep.subr.mxu0 0.0
    %317 = vmatpush1.msra.mxu0 0.0
    %318 = vmatprep.subr.mxu0 0.0
    %319 = vmatpush1.msra.mxu0 0.0
    %320 = vmatprep.subr.mxu0 0.0
    %321 = vmatpush1.msra.mxu0 0.0
    %322 = vmatprep.subr.mxu0 0.0
    %323 = vmatpush1.msra.mxu0 0.0
    %324 = vmatprep.subr.mxu0 0.0
    %325 = vmatpush1.msra.mxu0 0.0
    %326 = vmatprep.subr.mxu0 0.0
    %327 = vmatpush1.msra.mxu0 %v291
    %328 = vmatprep.subr.mxu0 0.0
    %329 = vmatpush1.msra.mxu0 %v290
    %330 = vmatprep.subr.mxu0 0.0
    %331 = vmatpush1.msra.mxu0 %v289
    %332 = vmatprep.subr.mxu0 0.0
    %333 = vmatpush1.msra.mxu0 %v288
    %334 = vmatprep.subr.mxu0 0.0
    %335 = vmatpush2.msra.mxu0 0.0
    %336 = vmatprep.subr.mxu0 0.0
    %337 = vmatpush2.msra.mxu0 0.0
    %338 = vmatprep.subr.mxu0 0.0
    %339 = vmatpush2.msra.mxu0 0.0
    %340 = vmatprep.subr.mxu0 0.0
    %341 = vmatpush2.msra.mxu0 0.0
    %342 = vmatprep.subr.mxu0 0.0
    %343 = vmatpush2.msra.mxu0 0.0
    %344 = vmatprep.subr.mxu0 0.0
    %345 = vmatpush2.msra.mxu0 0.0
    %346 = vmatprep.subr.mxu0 0.0
    %347 = vmatpush2.msra.mxu0 0.0
    %348 = vmatprep.subr.mxu0 0.0
    %349 = vmatpush2.msra.mxu0 0.0
    %350 = vmatprep.subr.mxu0 0.0
    %351 = vmatpush2.msra.mxu0 0.0
    %352 = vmatprep.subr.mxu0 0.0
    %353 = vmatpush2.msra.mxu0 0.0
    %354 = vmatprep.subr.mxu0 0.0
    %355 = vmatpush2.msra.mxu0 0.0
    %356 = vmatprep.subr.mxu0 0.0
    %357 = vmatpush2.msra.mxu0 0.0
    %358 = vmatprep.subr.mxu0 0.0
    %359 = vmatpush2.msra.mxu0 0.0
    %360 = vmatprep.subr.mxu0 0.0
    %361 = vmatpush2.msra.mxu0 0.0
    %362 = vmatprep.subr.mxu0 0.0
    %363 = vmatpush2.msra.mxu0 0.0
    %364 = vmatprep.subr.mxu0 0.0
    %365 = vmatpush2.msra.mxu0 0.0
    %366 = vmatprep.mubr.f32.mxu0 0.0
    %367 = vmatmul.mubr.f32.gmra.mxu0 %v300
    %v368 = vpop.f32.mrf.mxu0
    %v369 = vadd.f32 %v297, %v368
    %v370 = vpop.f32.mrf.mxu0
    %371 = vdwg.mxu0
    %vm372 = vcmask 123904
    %373 = vst.msk [vmem:[#allocation2] sm:$0x3] %vm372, %v369
    // Predicated region
    $region30: #{tpu_custom_call.1} parent=1 // pred_check
      _
    $region31: #{tpu_custom_call.1} parent=1 // pred_check_branch
      %375 = sbr.rel (0) target = $region33
    $region32: #{tpu_custom_call.1} parent=1 // pred_region
      %s377 = ssub.s32 32, 32
      %378 = vsyncadd [#allocation3], %s377
      %s380 = sshll.u32 [#allocation2], 4
      %s381 = int_to_ptr.vmem [resolvable:$true] %s380
      %383 = dma.vmem_to_hbm [thread:$0]  %s381, 32, %s7, [#allocation3]
    $region33: #{tpu_custom_call.1} parent=1 // pred_fallthru
      _
    // Predicated region
    $region34: #{tpu_custom_call.1} parent=1 // pred_check
      _
    $region35: #{tpu_custom_call.1} parent=1 // pred_check_branch
      %385 = sbr.rel (0) target = $region37
    $region36: #{tpu_custom_call.1} parent=1 // pred_region
      %386 = dma.done [#allocation3], 32
    $region37: #{tpu_custom_call.1} parent=1 // pred_fallthru
      _
    %387 = vsyncpa [#allocation3], 1

</llo_original>
